<compile_context>
chip_gen: v7x
topology: tpu7x:2x2x1
jax: 0.10.0
libtpu: 0.0.40
codegen_flags: <defaults>
</compile_context>

<pallas_src>
import jax
import jax.numpy as jnp
from jax.experimental import pallas as pl
from jax.experimental.pallas import tpu as pltpu


# ----------------------------------------------------------------------------
# Pallas kernel: classifier-free-guidance combination (elementwise hot path)
#   out = out_uncond + scale * (out_cond - out_uncond)
# ----------------------------------------------------------------------------
def _cfg_kernel(scale_ref, cond_ref, uncond_ref, out_ref):
    s = scale_ref[0].astype(jnp.float32)          # scalar guidance weight (SMEM)
    u = uncond_ref[...].astype(jnp.float32)
    c = cond_ref[...].astype(jnp.float32)
    out_ref[...] = (u + s * (c - u)).astype(out_ref.dtype)


def cfg_combine_fused(cond_list, uncond_list, scale, *, lane=512, max_tile_rows=256):
    """Fused CFG mix over a list of (cond, uncond) tensor pairs.

    All tensors are flattened, concatenated, zero-padded and packed into a
    lane-dense (rows_padded, lane) slab, processed by a tiled, pipelined
    Pallas kernel, then unpacked back to the original shapes.
    """
    dtype = cond_list[0].dtype
    shapes = [x.shape for x in cond_list]
    sizes = [x.size for x in cond_list]
    total = sum(sizes)

    rows = pl.cdiv(total, lane)
    # TILE_ROWS: multiple of 8 (sublane), capped so one block is <= ~512 KiB
    # (3 arrays x 2 pipeline buffers ~= 3 MiB, safely inside v7x's 64 MiB VMEM).
    tile_rows = min(max_tile_rows, ((rows + 7) // 8) * 8)
    rows_padded = ((rows + tile_rows - 1) // tile_rows) * tile_rows
    padded_total = rows_padded * lane

    def pack(xs):
        flat = jnp.concatenate([x.reshape(-1) for x in xs], axis=0)
        flat = jnp.pad(flat, (0, padded_total - total))
        return flat.reshape(rows_padded, lane)

    c2 = pack(cond_list)
    u2 = pack(uncond_list)

    grid = (rows_padded // tile_rows,)
    grid_spec = pltpu.PrefetchScalarGridSpec(
        num_scalar_prefetch=1,                    # `scale` -> SMEM, 1st kernel arg
        grid=grid,
        in_specs=[
            pl.BlockSpec((tile_rows, lane), lambda i, s: (i, 0)),   # cond
            pl.BlockSpec((tile_rows, lane), lambda i, s: (i, 0)),   # uncond
        ],
        out_specs=pl.BlockSpec((tile_rows, lane), lambda i, s: (i, 0)),
    )

    res = pl.pallas_call(
        _cfg_kernel,
        out_shape=jax.ShapeDtypeStruct((rows_padded, lane), dtype),
        grid_spec=grid_spec,
        compiler_params=pltpu.CompilerParams(
            dimension_semantics=("parallel",),    # shard tiles across TCs (v7x)
            vmem_limit_bytes=64 * 1024 * 1024,
        ),
    )(scale, c2, u2)

    flat = res.reshape(-1)
    outs, off = [], 0
    for shape, size in zip(shapes, sizes):
        outs.append(flat[off:off + size].reshape(shape))
        off += size
    return outs


# ----------------------------------------------------------------------------
# Synthetic deterministic stand-in for the wrapped diffusion model (glue).
# The real `self.model` is an arbitrary black-box; a small deterministic
# JAX stand-in is used.  The `gate` vector (1.0 = conditional, 0.0 = uncond)
# mimics how the real model consumes y['uncond'], and allows the cond/uncond
# passes to be batched into a single call.
# ----------------------------------------------------------------------------
def make_inner_model_params(c_body, c_hand, key):
    k = jax.random.split(key, 6)
    return {
        "w_body": jax.random.normal(k[0], (c_body, c_body), jnp.float32) * 0.1,
        "w_hand": jax.random.normal(k[1], (c_hand, c_hand), jnp.float32) * 0.1,
        "t_emb_body": jax.random.normal(k[2], (c_body,), jnp.float32) * 0.1,
        "t_emb_hand": jax.random.normal(k[3], (c_hand,), jnp.float32) * 0.1,
        "c_emb_body": jax.random.normal(k[4], (c_body,), jnp.float32),
        "c_emb_hand": jax.random.normal(k[5], (c_hand,), jnp.float32),
    }


def inner_model(params, x_body, x_hand, timesteps, cond, gate):
    # channel mix (1x1 conv) + timestep embedding + gated condition embedding
    t = jnp.sin(timesteps.astype(jnp.float32)).reshape(-1, 1, 1, 1)
    g = gate.astype(jnp.float32).reshape(-1, 1, 1, 1)
    cond_b = cond.astype(jnp.float32).reshape(-1, 1, 1, 1)

    def head(x, w, t_emb, c_emb):
        out = jnp.einsum("dc,bchw->bdhw", w, x)
        out = out + t_emb.reshape(1, -1, 1, 1) * t
        out = out + g * c_emb.reshape(1, -1, 1, 1) * cond_b
        return out

    out_body = head(x_body, params["w_body"], params["t_emb_body"], params["c_emb_body"])
    out_hand = head(x_hand, params["w_hand"], params["t_emb_hand"], params["c_emb_hand"])
    return out_body, out_hand


# ----------------------------------------------------------------------------
# ClassifierFreeSampleModel.forward
# ----------------------------------------------------------------------------
def classifier_free_sample_forward(params, x_body, x_hand, timesteps, y):
    B = x_body.shape[0]

    # Batch the conditional and unconditional passes (B -> 2B) into ONE
    # inner-model call: rows [0:B] conditional, rows [B:2B] unconditional.
    xb2 = jnp.concatenate([x_body, x_body], axis=0)
    xh2 = jnp.concatenate([x_hand, x_hand], axis=0)
    t2 = jnp.concatenate([timesteps, timesteps], axis=0)
    cond2 = jnp.concatenate([y["cond"], y["cond"]], axis=0)
    gate2 = jnp.concatenate(
        [jnp.ones((B,), jnp.float32), jnp.zeros((B,), jnp.float32)], axis=0)

    ob2, oh2 = inner_model(params, xb2, xh2, t2, cond2, gate2)
    out_body, out_uncond_body = ob2[:B], ob2[B:]
    out_hand, out_uncond_hand = oh2[:B], oh2[B:]

    # y['scale'] = torch.ones(1) * 3.0  ; scale.view(-1,1,1,1) broadcast
    scale = jnp.ones((1,), jnp.float32) * 3.0

    guided_body, guided_hand = cfg_combine_fused(
        [out_body, out_hand], [out_uncond_body, out_uncond_hand], scale)
    return guided_body, guided_hand


if __name__ == "__main__":
    key = jax.random.PRNGKey(0)
    k_xb, k_xh, k_t, k_c, k_p = jax.random.split(key, 5)

    B = 2
    x_body = jax.random.normal(k_xb, (B, 4, 8, 16), jnp.float32)   # NCHW
    x_hand = jax.random.normal(k_xh, (B, 6, 8, 16), jnp.float32)   # NCHW
    timesteps = jax.random.randint(k_t, (B,), 0, 1000)
    y = {"cond": jax.random.normal(k_c, (B,), jnp.float32)}

    params = make_inner_model_params(c_body=4, c_hand=6, key=k_p)

    guided_body, guided_hand = classifier_free_sample_forward(
        params, x_body, x_hand, timesteps, y)
    jax.block_until_ready((guided_body, guided_hand))

    # reference check (pure JAX) of the CFG combination
    ones = jnp.ones((B,), jnp.float32)
    zeros = jnp.zeros((B,), jnp.float32)
    ob, oh = inner_model(params, x_body, x_hand, timesteps, y["cond"], ones)
    ub, uh = inner_model(params, x_body, x_hand, timesteps, y["cond"], zeros)
    ref_body = ub + 3.0 * (ob - ub)
    ref_hand = uh + 3.0 * (oh - uh)
    assert jnp.allclose(guided_body, ref_body, atol=1e-5, rtol=1e-5)
    assert jnp.allclose(guided_hand, ref_hand, atol=1e-5, rtol=1e-5)
    assert guided_body.shape == x_body.shape and guided_hand.shape == x_hand.shape

    print("KERNEL_OK")
</pallas_src>

<mosaic_0001>
module attributes {stable_mosaic.version = 11 : i64} {
  func.func @_cfg_kernel(%arg0: i32, %arg1: memref<1xf32, #tpu.memory_space<smem>>, %arg2: memref<8x512xf32, #tpu.memory_space<vmem>>, %arg3: memref<8x512xf32, #tpu.memory_space<vmem>>, %arg4: memref<8x512xf32, #tpu.memory_space<vmem>>) attributes {dimension_semantics = [#tpu.dimension_semantics<parallel>], iteration_bounds = array<i64: 1>, scalar_prefetch = 1 : i64, scratch_operands = 0 : i64, tpu.core_type = #tpu.core_type<tc>, window_params = [{transform_indices = @transform_0, window_bounds = array<i64: 8, 512>}, {transform_indices = @transform_1, window_bounds = array<i64: 8, 512>}, {transform_indices = @transform_2, window_bounds = array<i64: 8, 512>}]} {
    %c0 = arith.constant 0 : index
    %0 = memref.load %arg1[%c0] : memref<1xf32, #tpu.memory_space<smem>>
    %c0_0 = arith.constant 0 : index
    %c0_1 = arith.constant 0 : index
    %1 = vector.load %arg3[%c0_0, %c0_1] : memref<8x512xf32, #tpu.memory_space<vmem>>, vector<8x512xf32>
    %c0_2 = arith.constant 0 : index
    %c0_3 = arith.constant 0 : index
    %2 = vector.load %arg2[%c0_2, %c0_3] : memref<8x512xf32, #tpu.memory_space<vmem>>, vector<8x512xf32>
    %3 = arith.subf %2, %1 : vector<8x512xf32>
    %4 = vector.broadcast %0 : f32 to vector<8x512xf32>
    %5 = arith.mulf %4, %3 : vector<8x512xf32>
    %6 = arith.addf %1, %5 : vector<8x512xf32>
    %c0_4 = arith.constant 0 : index
    %c0_5 = arith.constant 0 : index
    %7 = vector.load %arg4[%c0_4, %c0_5] : memref<8x512xf32, #tpu.memory_space<vmem>>, vector<8x512xf32>
    tpu.vector_store %arg4[%c0_4, %c0_5], %6 {strides = array<i32>} : memref<8x512xf32, #tpu.memory_space<vmem>>, vector<8x512xf32>,
    return
  }
  func.func @transform_0(%arg0: i32, %arg1: memref<1xf32, #tpu.memory_space<smem>>) -> (i32, i32) {
    %c0_i32 = arith.constant 0 : i32
    %c0_i32_0 = arith.constant 0 : i32
    return %arg0, %c0_i32 : i32, i32
  }
  func.func @transform_1(%arg0: i32, %arg1: memref<1xf32, #tpu.memory_space<smem>>) -> (i32, i32) {
    %c0_i32 = arith.constant 0 : i32
    %c0_i32_0 = arith.constant 0 : i32
    return %arg0, %c0_i32 : i32, i32
  }
  func.func @transform_2(%arg0: i32, %arg1: memref<1xf32, #tpu.memory_space<smem>>) -> (i32, i32) {
    %c0_i32 = arith.constant 0 : i32
    %c0_i32_0 = arith.constant 0 : i32
    return %arg0, %c0_i32 : i32, i32
  }
}

</mosaic_0001>

<llo_original>
// kernel: tpu_custom_call.1
$region0: #{tpu_custom_call.1}
  #allocation0 [shape = 'u32[]', space=smem, size = 0x4, offset = 0x4, fixed_abs, tag = 'smem constant byte address 0x4 - core index']
  #allocation1 [shape = 'u32[144,128]{1,0:T(1,128)}', space=vmem, size = 0x12000, scoped, tag = 'internal scratch']
  #allocation2 [shape = 's32[1]{0}', space=sflag, size = 0x4, scoped, tag = 'scoped memory for tpu_custom_call.1']
  #allocation3 [shape = 'f32[1]{0:T(128)S(6)}', space=smem, size = 0x200, scoped, tag = 'prefetched SMEM operand 0']
  %s0 = inlined_call_operand.<no memory space> [shape: f32[1], index: 0, kind: input, shape index: {}]
  %s1 = inlined_call_operand.hbm [shape: f32[8,512], index: 1, kind: input, shape index: {}]
  %s2 = inlined_call_operand.hbm [shape: f32[8,512], index: 2, kind: input, shape index: {}]
  %s3 = inlined_call_operand.hbm [shape: f32[8,512], index: 3, kind: output, shape index: {}]
  %s4 = sld [smem:[#allocation0]]
  $region26: #{tpu_custom_call.1} parent=0
    _
  %s6 = ssub.s32 1, %s4
  %s7 = scalar_select 0, %s6, %s4
  %8 = sst [smem:[#allocation3]] %s0
  $region1: #{tpu_custom_call.1} parent=0
    #allocation4 [shape = 'u8[16384]{0}', space=vmem, size = 0x4000, scoped, tag = 'input window, operand 1, single buffered']
    #allocation5 [shape = 's32[1]{0}', space=sflag, size = 0x4, scoped, tag = 'scoped memory for tpu_custom_call.1']
    #allocation6 [shape = 's32[1]{0}', space=sflag, size = 0x4, scoped, tag = 'scoped memory for tpu_custom_call.1']
    #allocation7 [shape = 'u8[16384]{0}', space=vmem, size = 0x4000, scoped, tag = 'input window, operand 2, single buffered']
    #allocation8 [shape = 's32[1]{0}', space=sflag, size = 0x4, scoped, tag = 'scoped memory for tpu_custom_call.1']
    #allocation9 [shape = 'u8[16384]{0}', space=vmem, size = 0x4000, scoped, tag = 'output window, operand 0, single buffered']
    %9 = vsyncpa [#allocation5], 0
    %10 = vsyncpa [#allocation8], 0
    %11 = vsyncpa [#allocation6], 0
    // Predicated region
    $region2: #{tpu_custom_call.1} parent=1 // pred_check
      _
    $region3: #{tpu_custom_call.1} parent=1 // pred_check_branch
      %13 = sbr.rel (0) target = $region5
    $region4: #{tpu_custom_call.1} parent=1 // pred_region
      %s15 = ssub.s32 512, 512
      %16 = vsyncadd [#allocation5], %s15
      %s18 = sshll.u32 [#allocation4], 4
      %s19 = int_to_ptr.vmem [resolvable:$true] %s18
      %21 = dma.hbm_to_vmem [thread:$0]  %s1, 512, %s19, [#allocation5]
    $region5: #{tpu_custom_call.1} parent=1 // pred_fallthru
      _
    // Predicated region
    $region6: #{tpu_custom_call.1} parent=1 // pred_check
      _
    $region7: #{tpu_custom_call.1} parent=1 // pred_check_branch
      %23 = sbr.rel (0) target = $region9
    $region8: #{tpu_custom_call.1} parent=1 // pred_region
      %s25 = ssub.s32 512, 512
      %26 = vsyncadd [#allocation8], %s25
      %s28 = sshll.u32 [#allocation7], 4
      %s29 = int_to_ptr.vmem [resolvable:$true] %s28
      %31 = dma.hbm_to_vmem [thread:$0]  %s2, 512, %s29, [#allocation8]
    $region9: #{tpu_custom_call.1} parent=1 // pred_fallthru
      _
    // Predicated region
    $region10: #{tpu_custom_call.1} parent=1 // pred_check
      _
    $region11: #{tpu_custom_call.1} parent=1 // pred_check_branch
      %33 = sbr.rel (0) target = $region13
    $region12: #{tpu_custom_call.1} parent=1 // pred_region
      %34 = dma.done [#allocation5], 512
    $region13: #{tpu_custom_call.1} parent=1 // pred_fallthru
      _
    // Predicated region
    $region14: #{tpu_custom_call.1} parent=1 // pred_check
      _
    $region15: #{tpu_custom_call.1} parent=1 // pred_check_branch
      %36 = sbr.rel (0) target = $region17
    $region16: #{tpu_custom_call.1} parent=1 // pred_region
      %37 = dma.done [#allocation8], 512
    $region17: #{tpu_custom_call.1} parent=1 // pred_fallthru
      _
    %s38 = sld [smem:[#allocation3]]
    %v39 = vld [vmem:[#allocation7] sm:$0xff]
    %v40 = vld [vmem:[#allocation7 + $0x8] sm:$0xff]
    %v41 = vld [vmem:[#allocation7 + $0x10] sm:$0xff]
    %v42 = vld [vmem:[#allocation7 + $0x18] sm:$0xff]
    %v43 = vld [vmem:[#allocation4] sm:$0xff]
    %v44 = vld [vmem:[#allocation4 + $0x8] sm:$0xff]
    %v45 = vld [vmem:[#allocation4 + $0x10] sm:$0xff]
    %v46 = vld [vmem:[#allocation4 + $0x18] sm:$0xff]
    %v47 = vsub.f32 %v43, %v39
    %v48 = vsub.f32 %v44, %v40
    %v49 = vsub.f32 %v45, %v41
    %v50 = vsub.f32 %v46, %v42
    %v51 = vstv %s38
    %v52 = vmul.f32 %v51, %v47
    %v53 = vmul.f32 %v51, %v48
    %v54 = vmul.f32 %v51, %v49
    %v55 = vmul.f32 %v51, %v50
    %v56 = vadd.f32 %v39, %v52
    %v57 = vadd.f32 %v40, %v53
    %v58 = vadd.f32 %v41, %v54
    %v59 = vadd.f32 %v42, %v55
    %60 = vst [vmem:[#allocation9] sm:$0xff] %v56
    %61 = vst [vmem:[#allocation9 + $0x8] sm:$0xff] %v57
    %62 = vst [vmem:[#allocation9 + $0x10] sm:$0xff] %v58
    %63 = vst [vmem:[#allocation9 + $0x18] sm:$0xff] %v59
    // Predicated region
    $region18: #{tpu_custom_call.1} parent=1 // pred_check
      _
    $region19: #{tpu_custom_call.1} parent=1 // pred_check_branch
      %65 = sbr.rel (0) target = $region21
    $region20: #{tpu_custom_call.1} parent=1 // pred_region
      %s67 = ssub.s32 512, 512
      %68 = vsyncadd [#allocation6], %s67
      %s70 = sshll.u32 [#allocation9], 4
      %s71 = int_to_ptr.vmem [resolvable:$true] %s70
      %73 = dma.vmem_to_hbm [thread:$0]  %s71, 512, %s3, [#allocation6]
    $region21: #{tpu_custom_call.1} parent=1 // pred_fallthru
      _
    // Predicated region
    $region22: #{tpu_custom_call.1} parent=1 // pred_check
      _
    $region23: #{tpu_custom_call.1} parent=1 // pred_check_branch
      %75 = sbr.rel (0) target = $region25
    $region24: #{tpu_custom_call.1} parent=1 // pred_region
      %76 = dma.done [#allocation6], 512
    $region25: #{tpu_custom_call.1} parent=1 // pred_fallthru
      _
    %77 = vsyncpa [#allocation5], 1
    %78 = vsyncpa [#allocation8], 1
    %79 = vsyncpa [#allocation6], 1

</llo_original>
